<compile_context>
chip_gen: v5e
topology: v5e:2x2
jax: 0.10.0
libtpu: 0.0.40
codegen_flags: <defaults>
</compile_context>

<pallas_src>
import jax
import jax.numpy as jnp
from jax.experimental import pallas as pl
from jax.experimental.pallas import tpu as pltpu

LANE = 128            # vreg lane width: pad hidden/matmul-N to this for MXU density
SUBLANE = 8           # f32 sublane granularity for batch tiles
DEFAULT_TILE_B = 2048  # batch tile: big enough to amortize per-grid-step overhead
NUM_CORES_TARGET = 2   # keep >= 2 grid steps for large B (v7x has 2 TCs/chip)


def _round_up(n, m):
    return ((n + m - 1) // m) * m


def qnetwork_kernel(x_ref, w1_ref, b1_ref, w2_ref, b2_ref, o_ref):
    # Hot path: two MXU matmuls + VPU relu, fully fused in VMEM.
    out_dim = o_ref.shape[-1]
    x = x_ref[...]
    h = jnp.dot(x, w1_ref[...], preferred_element_type=jnp.float32) + b1_ref[...]
    h = jnp.maximum(h, 0.0)  # torch.relu
    # w2 is lane-padded for the MXU; slice the padding away in-register so only
    # the real output columns are stored to HBM.
    out_full = jnp.dot(h, w2_ref[...], preferred_element_type=jnp.float32)
    o_ref[...] = (out_full[:, :out_dim] + b2_ref[...]).astype(o_ref.dtype)


def prepare_qnetwork_params(w1, b1, w2, b2, dtype=jnp.float32):
    """One-time parameter prep (NOT in the hot path).

    PyTorch layout in:  w1 (32, in), b1 (32,), w2 (out, 32), b2 (out,)
    Kernel layout out:  w1_t (in, 128), b1 (1, 128), w2_t (128, out_pad),
                        b2 (1, out)  -- hidden (and w2's N dim) zero-padded to
                        full 128-lane width for MXU density; the padding is
                        numerically exact and never reaches HBM on the output.
    """
    hidden, input_dim = w1.shape
    output_dim = w2.shape[0]
    h_pad = _round_up(hidden, LANE)
    o_pad = _round_up(output_dim, LANE)

    w1_t = jnp.zeros((input_dim, h_pad), dtype).at[:, :hidden].set(
        jnp.asarray(w1, dtype).T)
    b1_r = jnp.zeros((1, h_pad), dtype).at[:, :hidden].set(
        jnp.asarray(b1, dtype))
    w2_t = jnp.zeros((h_pad, o_pad), dtype).at[:hidden, :output_dim].set(
        jnp.asarray(w2, dtype).T)
    b2_r = jnp.asarray(b2, dtype).reshape(1, output_dim)
    return (w1_t, b1_r, w2_t, b2_r, output_dim)


def qnetwork_forward(x, params, tile_b=DEFAULT_TILE_B):
    """x: (B, input_dim); params: output of prepare_qnetwork_params."""
    w1_t, b1_r, w2_t, b2_r, output_dim = params
    x = jnp.asarray(x, jnp.float32)
    B, input_dim = x.shape
    h_pad = w1_t.shape[1]
    o_pad = w2_t.shape[1]

    # Batch tile: multiple of 8 (f32 sublane), capped so large B yields >= 2
    # grid steps (v7x megacore).  No jnp.pad: the cdiv grid lets Pallas handle
    # the ragged last block (edge reads padded, edge writes masked).
    tile_cap = _round_up(pl.cdiv(B, NUM_CORES_TARGET), SUBLANE)
    tile_b_eff = max(SUBLANE, min(_round_up(tile_b, SUBLANE), tile_cap))
    grid = (pl.cdiv(B, tile_b_eff),)

    # Real (unpadded) HBM traffic + actual kernel flops for the scheduler.
    flops = 2 * B * (input_dim * h_pad + h_pad * o_pad)
    bytes_accessed = 4 * (B * input_dim + w1_t.size + b1_r.size
                          + w2_t.size + b2_r.size + B * output_dim)

    out = pl.pallas_call(
        qnetwork_kernel,
        out_shape=jax.ShapeDtypeStruct((B, output_dim), jnp.float32),
        grid=grid,
        in_specs=[
            # x tiles stream over the batch grid (auto double-buffered).
            pl.BlockSpec((tile_b_eff, input_dim), lambda i: (i, 0)),
            # Weights / biases: constant index_map -> resident in VMEM.
            pl.BlockSpec(w1_t.shape, lambda i: (0, 0)),
            pl.BlockSpec(b1_r.shape, lambda i: (0, 0)),
            pl.BlockSpec(w2_t.shape, lambda i: (0, 0)),
            pl.BlockSpec(b2_r.shape, lambda i: (0, 0)),
        ],
        # Block last dim == full array dim (output_dim), so no 128-lane padding
        # ever reaches HBM.
        out_specs=pl.BlockSpec((tile_b_eff, output_dim), lambda i: (i, 0)),
        compiler_params=pltpu.CompilerParams(
            # Batch iterations are independent: shard across TCs on v7x.
            dimension_semantics=("parallel",),
            # Well above the footprint, safely below v7x's 64 MiB physical VMEM.
            vmem_limit_bytes=48 * 1024 * 1024,
        ),
        cost_estimate=pl.CostEstimate(
            flops=flops, transcendentals=0, bytes_accessed=bytes_accessed),
    )(x, w1_t, b1_r, w2_t, b2_r)

    return out


def init_qnetwork_params(key, input_dim, output_dim, hidden=32):
    """Deterministic synthetic init matching nn.Linear parameter shapes
    (uniform(-1/sqrt(fan_in), 1/sqrt(fan_in)), like PyTorch's default)."""
    k1, k2, k3, k4 = jax.random.split(key, 4)
    bound1 = 1.0 / jnp.sqrt(input_dim)
    bound2 = 1.0 / jnp.sqrt(hidden)
    w1 = jax.random.uniform(k1, (hidden, input_dim), jnp.float32, -bound1, bound1)
    b1 = jax.random.uniform(k2, (hidden,), jnp.float32, -bound1, bound1)
    w2 = jax.random.uniform(k3, (output_dim, hidden), jnp.float32, -bound2, bound2)
    b2 = jax.random.uniform(k4, (output_dim,), jnp.float32, -bound2, bound2)
    return w1, b1, w2, b2


if __name__ == "__main__":
    key = jax.random.PRNGKey(0)
    batch, input_dim, output_dim = 8, 16, 4

    k_x, k_p = jax.random.split(key)
    x = jax.random.normal(k_x, (batch, input_dim), jnp.float32)
    w1, b1, w2, b2 = init_qnetwork_params(k_p, input_dim, output_dim)

    # One-time parameter prep (transpose / pad / cast hoisted out of hot path).
    params = prepare_qnetwork_params(w1, b1, w2, b2)

    out = qnetwork_forward(x, params)
    out = jax.block_until_ready(out)

    # Pure-JAX reference of the PyTorch forward: fc2(relu(fc1(x)))
    ref = jnp.maximum(x @ w1.T + b1, 0.0) @ w2.T + b2
    assert out.shape == (batch, output_dim)
    assert jnp.allclose(out, ref, atol=1e-5, rtol=1e-5)

    # Exercise the multi-step ragged grid (>= 2 grid steps, masked edge block).
    big_b = 1030
    x_big = jax.random.normal(jax.random.PRNGKey(1), (big_b, input_dim), jnp.float32)
    out_big = jax.block_until_ready(qnetwork_forward(x_big, params))
    ref_big = jnp.maximum(x_big @ w1.T + b1, 0.0) @ w2.T + b2
    assert out_big.shape == (big_b, output_dim)
    assert jnp.allclose(out_big, ref_big, atol=1e-5, rtol=1e-5)

    # TODO(synk): evaluate bf16 activations/weights (f32 accumulation) once
    # Q-value numerics tolerance is confirmed by the RL consumer.

    print("KERNEL_OK")
</pallas_src>

<mosaic_0001>
module attributes {stable_mosaic.version = 11 : i64} {
  func.func @qnetwork_kernel(%arg0: i32, %arg1: memref<8x16xf32, #tpu.memory_space<vmem>>, %arg2: memref<16x128xf32, #tpu.memory_space<vmem>>, %arg3: memref<1x128xf32, #tpu.memory_space<vmem>>, %arg4: memref<128x128xf32, #tpu.memory_space<vmem>>, %arg5: memref<1x4xf32, #tpu.memory_space<vmem>>, %arg6: memref<8x4xf32, #tpu.memory_space<vmem>>) attributes {dimension_semantics = [#tpu.dimension_semantics<parallel>], iteration_bounds = array<i64: 1>, scalar_prefetch = 0 : i64, scratch_operands = 0 : i64, tpu.core_type = #tpu.core_type<tc>, window_params = [{transform_indices = @transform_0, window_bounds = array<i64: 8, 16>}, {pipeline_mode = #tpu.pipeline_mode<synchronous>, transform_indices = @transform_1, window_bounds = array<i64: 16, 128>}, {pipeline_mode = #tpu.pipeline_mode<synchronous>, transform_indices = @transform_2, window_bounds = array<i64: 1, 128>}, {pipeline_mode = #tpu.pipeline_mode<synchronous>, transform_indices = @transform_3, window_bounds = array<i64: 128, 128>}, {pipeline_mode = #tpu.pipeline_mode<synchronous>, transform_indices = @transform_4, window_bounds = array<i64: 1, 4>}, {transform_indices = @transform_5, window_bounds = array<i64: 8, 4>}]} {
    %c0 = arith.constant 0 : index
    %c0_0 = arith.constant 0 : index
    %0 = vector.load %arg1[%c0, %c0_0] : memref<8x16xf32, #tpu.memory_space<vmem>>, vector<8x16xf32>
    %c0_1 = arith.constant 0 : index
    %c0_2 = arith.constant 0 : index
    %1 = vector.load %arg2[%c0_1, %c0_2] : memref<16x128xf32, #tpu.memory_space<vmem>>, vector<16x128xf32>
    %cst = arith.constant dense<0.000000e+00> : vector<8x128xf32>
    %2 = tpu.matmul %0, %1, %cst {dimension_numbers = #tpu.dot_dimension_numbers<[1], [0], [0], [1], [0, 0, 1, 1], [], []>} : vector<8x16xf32>, vector<16x128xf32>, vector<8x128xf32> -> vector<8x128xf32>
    %c0_3 = arith.constant 0 : index
    %c0_4 = arith.constant 0 : index
    %3 = vector.load %arg3[%c0_3, %c0_4] : memref<1x128xf32, #tpu.memory_space<vmem>>, vector<1x128xf32>
    %4 = vector.broadcast %3 : vector<1x128xf32> to vector<8x128xf32>
    %5 = arith.addf %2, %4 : vector<8x128xf32>
    %cst_5 = arith.constant 0.000000e+00 : f32
    %6 = vector.broadcast %cst_5 : f32 to vector<8x128xf32>
    %7 = arith.maximumf %5, %6 : vector<8x128xf32>
    %c0_6 = arith.constant 0 : index
    %c0_7 = arith.constant 0 : index
    %8 = vector.load %arg4[%c0_6, %c0_7] : memref<128x128xf32, #tpu.memory_space<vmem>>, vector<128x128xf32>
    %cst_8 = arith.constant dense<0.000000e+00> : vector<8x128xf32>
    %9 = tpu.matmul %7, %8, %cst_8 {dimension_numbers = #tpu.dot_dimension_numbers<[1], [0], [0], [1], [0, 0, 1, 1], [], []>} : vector<8x128xf32>, vector<128x128xf32>, vector<8x128xf32> -> vector<8x128xf32>
    %10 = vector.extract_strided_slice %9 {offsets = [0, 0], sizes = [8, 4], strides = [1, 1]} : vector<8x128xf32> to vector<8x4xf32>
    %c0_9 = arith.constant 0 : index
    %c0_10 = arith.constant 0 : index
    %11 = vector.load %arg5[%c0_9, %c0_10] : memref<1x4xf32, #tpu.memory_space<vmem>>, vector<1x4xf32>
    %12 = vector.broadcast %11 : vector<1x4xf32> to vector<8x4xf32>
    %13 = arith.addf %10, %12 : vector<8x4xf32>
    %c0_11 = arith.constant 0 : index
    %c0_12 = arith.constant 0 : index
    %14 = vector.load %arg6[%c0_11, %c0_12] : memref<8x4xf32, #tpu.memory_space<vmem>>, vector<8x4xf32>
    tpu.vector_store %arg6[%c0_11, %c0_12], %13 {strides = array<i32>} : memref<8x4xf32, #tpu.memory_space<vmem>>, vector<8x4xf32>,
    return
  }
  func.func @transform_0(%arg0: i32) -> (i32, i32) {
    %c0_i32 = arith.constant 0 : i32
    %c0_i32_0 = arith.constant 0 : i32
    return %arg0, %c0_i32 : i32, i32
  }
  func.func @transform_1(%arg0: i32) -> (i32, i32) {
    %c0_i32 = arith.constant 0 : i32
    %c0_i32_0 = arith.constant 0 : i32
    %c0_i32_1 = arith.constant 0 : i32
    return %c0_i32, %c0_i32_0 : i32, i32
  }
  func.func @transform_2(%arg0: i32) -> (i32, i32) {
    %c0_i32 = arith.constant 0 : i32
    %c0_i32_0 = arith.constant 0 : i32
    %c0_i32_1 = arith.constant 0 : i32
    return %c0_i32, %c0_i32_0 : i32, i32
  }
  func.func @transform_3(%arg0: i32) -> (i32, i32) {
    %c0_i32 = arith.constant 0 : i32
    %c0_i32_0 = arith.constant 0 : i32
    %c0_i32_1 = arith.constant 0 : i32
    return %c0_i32, %c0_i32_0 : i32, i32
  }
  func.func @transform_4(%arg0: i32) -> (i32, i32) {
    %c0_i32 = arith.constant 0 : i32
    %c0_i32_0 = arith.constant 0 : i32
    %c0_i32_1 = arith.constant 0 : i32
    return %c0_i32, %c0_i32_0 : i32, i32
  }
  func.func @transform_5(%arg0: i32) -> (i32, i32) {
    %c0_i32 = arith.constant 0 : i32
    %c0_i32_0 = arith.constant 0 : i32
    return %arg0, %c0_i32 : i32, i32
  }
}

</mosaic_0001>

<llo_original>
// kernel: tpu_custom_call.1
$region0: #{tpu_custom_call.1}
  #allocation0 [shape = 'u32[]', space=smem, size = 0x4, offset = 0x4, fixed_abs, tag = 'smem constant byte address 0x4 - core index']
  #allocation1 [shape = 'u32[72,128]{1,0:T(1,128)}', space=vmem, size = 0x9000, scoped, tag = 'internal scratch']
  %s0 = inlined_call_operand.hbm [shape: f32[8,16], index: 0, kind: input, shape index: {}]
  %s1 = inlined_call_operand.hbm [shape: f32[16,128], index: 1, kind: input, shape index: {}]
  %s2 = inlined_call_operand.vmem [shape: f32[1,128], index: 2, kind: input, shape index: {}]
  %s3 = inlined_call_operand.hbm [shape: f32[128,128], index: 3, kind: input, shape index: {}]
  %s4 = inlined_call_operand.vmem [shape: f32[1,4], index: 4, kind: input, shape index: {}]
  %s5 = inlined_call_operand.vmem [shape: f32[8,4], index: 5, kind: output, shape index: {}]
  %s6 = sld [smem:[#allocation0]]
  $region42: #{tpu_custom_call.1} parent=0
    _
  %s8 = ssub.s32 1, %s6
  %s9 = scalar_select 0, %s8, %s6
  $region1: #{tpu_custom_call.1} parent=0
    #allocation2 [shape = 'u8[4096]{0}', space=vmem, size = 0x1000, scoped, tag = 'input window, operand 0, single buffered']
    #allocation3 [shape = 's32[1]{0}', space=sflag, size = 0x4, scoped, tag = 'scoped memory for tpu_custom_call.1']
    #allocation4 [shape = 'u8[8192]{0}', space=vmem, size = 0x2000, scoped, tag = 'input window, operand 1, single buffered']
    #allocation5 [shape = 's32[1]{0}', space=sflag, size = 0x4, scoped, tag = 'scoped memory for tpu_custom_call.1']
    #allocation6 [shape = 'u8[65536]{0}', space=vmem, size = 0x10000, scoped, tag = 'input window, operand 3, single buffered']
    %10 = vsyncpa [#allocation3], 0
    %11 = vsyncpa [#allocation5], 0
    // Predicated region
    $region2: #{tpu_custom_call.1} parent=1 // pred_check
      _
    $region3: #{tpu_custom_call.1} parent=1 // pred_check_branch
      %13 = sbr.rel (0) target = $region5
    $region4: #{tpu_custom_call.1} parent=1 // pred_region
      %15 = vsyncadd [#allocation3], 0
      %s17 = sshll.u32 %s0, 4
      %s18 = int_to_ptr.hbm [resolvable:$true] %s17
      %s19 = sshll.u32 [#allocation2], 4
      %s20 = int_to_ptr.vmem [resolvable:$true] %s19
      %22 = dma.hbm_to_vmem [thread:$0]  %s18, 128, %s20, [#allocation3]
    $region5: #{tpu_custom_call.1} parent=1 // pred_fallthru
      _
    // Predicated region
    $region6: #{tpu_custom_call.1} parent=1 // pred_check
      _
    $region7: #{tpu_custom_call.1} parent=1 // pred_check_branch
      %24 = sbr.rel (0) target = $region9
    $region8: #{tpu_custom_call.1} parent=1 // pred_region
      %26 = vsyncadd [#allocation5], 0
      %s27 = sshll.u32 %s1, 4
      %s28 = int_to_ptr.hbm [resolvable:$true] %s27
      %s29 = sshll.u32 [#allocation4], 4
      %s30 = int_to_ptr.vmem [resolvable:$true] %s29
      %35 = dma.hbm_to_vmem [thread:$0]  %s28, 256, %s30, [#allocation5], 128, 128, 8
    $region9: #{tpu_custom_call.1} parent=1 // pred_fallthru
      _
    // Predicated region
    $region10: #{tpu_custom_call.1} parent=1 // pred_check
      _
    $region11: #{tpu_custom_call.1} parent=1 // pred_check_branch
      %37 = sbr.rel (0) target = $region13
    $region12: #{tpu_custom_call.1} parent=1 // pred_region
      _
    $region13: #{tpu_custom_call.1} parent=1 // pred_fallthru
      _
    // Predicated region
    $region14: #{tpu_custom_call.1} parent=1 // pred_check
      _
    $region15: #{tpu_custom_call.1} parent=1 // pred_check_branch
      %39 = sbr.rel (0) target = $region17
    $region16: #{tpu_custom_call.1} parent=1 // pred_region
      %41 = vsyncadd [#allocation5], 0
      %s42 = sshll.u32 %s3, 4
      %s43 = int_to_ptr.hbm [resolvable:$true] %s42
      %s44 = sshll.u32 [#allocation6], 4
      %s45 = int_to_ptr.vmem [resolvable:$true] %s44
      %50 = dma.hbm_to_vmem [thread:$0]  %s43, 2048, %s45, [#allocation5], 128, 128, 8
    $region17: #{tpu_custom_call.1} parent=1 // pred_fallthru
      _
    // Predicated region
    $region18: #{tpu_custom_call.1} parent=1 // pred_check
      _
    $region19: #{tpu_custom_call.1} parent=1 // pred_check_branch
      %52 = sbr.rel (0) target = $region21
    $region20: #{tpu_custom_call.1} parent=1 // pred_region
      _
    $region21: #{tpu_custom_call.1} parent=1 // pred_fallthru
      _
    // Predicated region
    $region22: #{tpu_custom_call.1} parent=1 // pred_check
      _
    $region23: #{tpu_custom_call.1} parent=1 // pred_check_branch
      %54 = sbr.rel (0) target = $region25
    $region24: #{tpu_custom_call.1} parent=1 // pred_region
      %56 = dma.done [#allocation3], 128
    $region25: #{tpu_custom_call.1} parent=1 // pred_fallthru
      _
    // Predicated region
    $region26: #{tpu_custom_call.1} parent=1 // pred_check
      _
    $region27: #{tpu_custom_call.1} parent=1 // pred_check_branch
      %58 = sbr.rel (0) target = $region29
    $region28: #{tpu_custom_call.1} parent=1 // pred_region
      %60 = dma.done [#allocation5], 256
    $region29: #{tpu_custom_call.1} parent=1 // pred_fallthru
      _
    // Predicated region
    $region30: #{tpu_custom_call.1} parent=1 // pred_check
      _
    $region31: #{tpu_custom_call.1} parent=1 // pred_check_branch
      %62 = sbr.rel (0) target = $region33
    $region32: #{tpu_custom_call.1} parent=1 // pred_region
      %64 = dma.done [#allocation5], 2048
    $region33: #{tpu_custom_call.1} parent=1 // pred_fallthru
      _
    %v65 = vld [vmem:[#allocation2] sm:$0xff]
    %v66 = vld [vmem:[#allocation4] sm:$0xff]
    %v67 = vld [vmem:[#allocation4 + $0x8] sm:$0xff]
    %v68 = vld [vmem:[%s2] sm:$0x1]
    %v70 = vperm.slane %v68, 0
    %vm72 = vcmask 130048
    %v74 = vsel %vm72, %v65, 0
    %76 = vmatpush.msra.mxu0 0.0
    %77 = vmatpush.msra.mxu0 0.0
    %78 = vmatpush.msra.mxu0 0.0
    %79 = vmatpush.msra.mxu0 0.0
    %80 = vmatpush.msra.mxu0 0.0
    %81 = vmatpush.msra.mxu0 0.0
    %82 = vmatpush.msra.mxu0 0.0
    %83 = vmatpush.msra.mxu0 0.0
    %84 = vmatpush.msra.mxu0 0.0
    %85 = vmatpush.msra.mxu0 0.0
    %86 = vmatpush.msra.mxu0 0.0
    %87 = vmatpush.msra.mxu0 0.0
    %88 = vmatpush.msra.mxu0 0.0
    %89 = vmatpush.msra.mxu0 0.0
    %90 = vmatpush.msra.mxu0 %v67
    %91 = vmatpush.msra.mxu0 %v66
    %92 = vmatmul.f32.gmra.mxu0 %v74
    %v93 = vpop.f32.mrf.mxu0
    %v94 = vadd.f32 %v70, %v93
    %95 = vdwg.mxu0
    %v96 = vmax.f32 %v94, 0.0
    %v97 = vld [vmem:[#allocation6] sm:$0xff]
    %v98 = vld [vmem:[#allocation6 + $0x8] sm:$0xff]
    %v99 = vld [vmem:[#allocation6 + $0x10] sm:$0xff]
    %v100 = vld [vmem:[#allocation6 + $0x18] sm:$0xff]
    %v101 = vld [vmem:[#allocation6 + $0x20] sm:$0xff]
    %v102 = vld [vmem:[#allocation6 + $0x28] sm:$0xff]
    %v103 = vld [vmem:[#allocation6 + $0x30] sm:$0xff]
    %v104 = vld [vmem:[#allocation6 + $0x38] sm:$0xff]
    %v105 = vld [vmem:[#allocation6 + $0x40] sm:$0xff]
    %v106 = vld [vmem:[#allocation6 + $0x48] sm:$0xff]
    %v107 = vld [vmem:[#allocation6 + $0x50] sm:$0xff]
    %v108 = vld [vmem:[#allocation6 + $0x58] sm:$0xff]
    %v109 = vld [vmem:[#allocation6 + $0x60] sm:$0xff]
    %v110 = vld [vmem:[#allocation6 + $0x68] sm:$0xff]
    %v111 = vld [vmem:[#allocation6 + $0x70] sm:$0xff]
    %v112 = vld [vmem:[#allocation6 + $0x78] sm:$0xff]
    %113 = vmatpush.msra.mxu0 %v112
    %114 = vmatpush.msra.mxu0 %v111
    %115 = vmatpush.msra.mxu0 %v110
    %116 = vmatpush.msra.mxu0 %v109
    %117 = vmatpush.msra.mxu0 %v108
    %118 = vmatpush.msra.mxu0 %v107
    %119 = vmatpush.msra.mxu0 %v106
    %120 = vmatpush.msra.mxu0 %v105
    %121 = vmatpush.msra.mxu0 %v104
    %122 = vmatpush.msra.mxu0 %v103
    %123 = vmatpush.msra.mxu0 %v102
    %124 = vmatpush.msra.mxu0 %v101
    %125 = vmatpush.msra.mxu0 %v100
    %126 = vmatpush.msra.mxu0 %v99
    %127 = vmatpush.msra.mxu0 %v98
    %128 = vmatpush.msra.mxu0 %v97
    %129 = vmatmul.f32.gmra.mxu0 %v96
    %v130 = vpop.f32.mrf.mxu0
    %v131 = vadd.f32 0.0, %v130
    %132 = vdwg.mxu0
    %v133 = vld [vmem:[%s4] sm:$0x1]
    %v135 = vperm.slane %v133, 0
    %v137 = vadd.f32 %v131, %v135
    %vm138 = vcmask 31744
    %139 = vst.msk [vmem:[%s5] sm:$0xff] %vm138, %v137
    // Predicated region
    $region34: #{tpu_custom_call.1} parent=1 // pred_check
      _
    $region35: #{tpu_custom_call.1} parent=1 // pred_check_branch
      %141 = sbr.rel (0) target = $region37
    $region36: #{tpu_custom_call.1} parent=1 // pred_region
      _
    $region37: #{tpu_custom_call.1} parent=1 // pred_fallthru
      _
    // Predicated region
    $region38: #{tpu_custom_call.1} parent=1 // pred_check
      _
    $region39: #{tpu_custom_call.1} parent=1 // pred_check_branch
      %143 = sbr.rel (0) target = $region41
    $region40: #{tpu_custom_call.1} parent=1 // pred_region
      _
    $region41: #{tpu_custom_call.1} parent=1 // pred_fallthru
      _
    %144 = vsyncpa [#allocation3], 1
    %145 = vsyncpa [#allocation5], 1

</llo_original>
